<compile_context>
chip_gen: v7x
topology: tpu7x:2x2x1
jax: 0.10.0
libtpu: 0.0.40
codegen_flags: <defaults>
</compile_context>

<pallas_src>
import functools

import jax
import jax.numpy as jnp
from jax import lax
from jax.experimental import pallas as pl
from jax.experimental.pallas import tpu as pltpu


# ----------------------------- parameters (norse defaults) -------------------
DT = 0.001
TAU_SYN_INV = 1.0 / 5e-3   # 200.0
TAU_MEM_INV = 1.0 / 1e-2   # 100.0
V_LEAK = 0.0
V_TH = 1.0
V_RESET = 0.0
RHO_RESET = 5.0

_PARAMS = dict(dt=DT, tau_syn_inv=TAU_SYN_INV, tau_mem_inv=TAU_MEM_INV,
               v_leak=V_LEAK, v_th=V_TH, v_reset=V_RESET, rho_reset=RHO_RESET)

_LANE = 128        # lane width: last dims padded to a multiple of this
_SUBLANE = 8       # sublane width: batch tiles are multiples of this
_MAX_TILE_B = 1024 # amortizes per-grid-step overhead; capped for sanity


# ----------------------------- small helpers ---------------------------------
def _round_up(n, m):
    return ((n + m - 1) // m) * m


def _pad_to(a, shape):
    pads = tuple((0, t - s) for s, t in zip(a.shape, shape))
    if all(p[1] == 0 for p in pads):
        return a
    return jnp.pad(a, pads)


def _vmem_budget_bytes():
    """~80% of this generation's per-core VMEM (v7x 64MiB, v5e/v6e 128MiB)."""
    try:
        cap = int(pltpu.get_tpu_info().vmem_capacity_bytes)
    except Exception:
        cap = 0
    if cap <= 0:
        cap = 64 * 1024 * 1024   # conservative fallback (v7x per-core VMEM)
    return int(0.80 * cap)


def _choose_tile_b(B, per_row_bytes, weight_bytes, max_tile_b=None):
    """Pick a batch tile from the VMEM budget left after resident weights."""
    budget = _vmem_budget_bytes()
    avail = max(budget - 2 * weight_bytes, 4 << 20)      # weights double-buffered
    rows = avail // (2 * per_row_bytes)                  # tiles double-buffered
    tile_cap = max(_SUBLANE, min(_MAX_TILE_B, (rows // _SUBLANE) * _SUBLANE))
    if max_tile_b is not None:
        tile_cap = max(_SUBLANE, min(tile_cap, _round_up(int(max_tile_b), _SUBLANE)))
    b8 = _round_up(B, _SUBLANE)
    if b8 > 2 * _SUBLANE:
        # at least 2 grid steps so the second TensorCore (v7x megacore) has work
        tile_b = min(tile_cap, _round_up(-(-b8 // 2), _SUBLANE))
    else:
        tile_b = min(tile_cap, b8)
    b_full = _round_up(b8, tile_b)
    return tile_b, b_full, budget


# ----------------------------- shared step math -------------------------------
def _step_math(x, z, v, i, rho, w_in, w_rec, g, *, dt, tau_syn_inv, tau_mem_inv,
               v_leak, v_th, v_reset, rho_reset):
    """One LIF-MC-refrac update on f32 state. Returns (z, v, i, rho) new."""
    a_mem = dt * tau_mem_inv
    syn_decay = 1.0 - dt * tau_syn_inv
    dn = (((1,), (1,)), ((), ()))   # contract on axis 1 of both: lhs @ rhs.T

    # multi-compartment coupling: keep v (threshold-sensitive) in f32; narrow
    # weights are upcast in VMEM (HBM traffic already saved).
    v_coupled = lax.dot_general(v, g.astype(v.dtype), dn,
                                preferred_element_type=jnp.float32)
    v_decayed = v + a_mem * ((v_leak - v) + i) + v_coupled

    i_decayed = i * syn_decay

    # jump currents: two accumulated MXU passes, no concat copy
    j_in = lax.dot_general(x.astype(w_in.dtype), w_in, dn,
                           preferred_element_type=jnp.float32)
    j_rec = lax.dot_general(z.astype(w_rec.dtype), w_rec, dn,
                            preferred_element_type=jnp.float32)
    i_new = i_decayed + j_in + j_rec

    # spikes / reset / refractory dynamics (boolean selects, no float blends)
    spike = v_decayed > v_th                  # heaviside(v_decayed - v_th)
    refrac = rho > 0.0                        # heaviside(rho)
    z_fire = jnp.logical_and(spike, jnp.logical_not(refrac))

    v_new = jnp.where(spike, v_reset, v_decayed)
    v_final = jnp.where(refrac, v, v_new)
    rho_new = jnp.where(z_fire, rho_reset,
                        jnp.maximum(rho - refrac.astype(rho.dtype), 0.0))
    return z_fire.astype(jnp.float32), v_final, i_new, rho_new


# ----------------------------- kernels ----------------------------------------
def _lif_mc_refrac_step_kernel(x_ref, z_ref, v_ref, i_ref, rho_ref,
                               w_in_ref, w_rec_ref, g_ref,
                               z_out_ref, v_out_ref, i_out_ref, rho_out_ref,
                               **params):
    z_new, v_new, i_new, rho_new = _step_math(
        x_ref[...], z_ref[...],
        v_ref[...].astype(jnp.float32),
        i_ref[...].astype(jnp.float32),
        rho_ref[...].astype(jnp.float32),
        w_in_ref[...], w_rec_ref[...], g_ref[...], **params)
    z_out_ref[...] = z_new.astype(z_out_ref.dtype)
    v_out_ref[...] = v_new.astype(v_out_ref.dtype)
    i_out_ref[...] = i_new.astype(i_out_ref.dtype)
    rho_out_ref[...] = rho_new.astype(rho_out_ref.dtype)


def _lif_mc_refrac_seq_kernel(x_ref, z0_ref, v0_ref, i0_ref, rho0_ref,
                              w_in_ref, w_rec_ref, g_ref,
                              zs_ref, zf_ref, vf_ref, if_ref, rhof_ref,
                              z_sc, v_sc, i_sc, rho_sc,
                              **params):
    t = pl.program_id(1)

    @pl.when(t == 0)
    def _():
        z_sc[...] = z0_ref[...].astype(jnp.float32)
        v_sc[...] = v0_ref[...].astype(jnp.float32)
        i_sc[...] = i0_ref[...].astype(jnp.float32)
        rho_sc[...] = rho0_ref[...].astype(jnp.float32)

    z_new, v_new, i_new, rho_new = _step_math(
        x_ref[0], z_sc[...], v_sc[...], i_sc[...], rho_sc[...],
        w_in_ref[...], w_rec_ref[...], g_ref[...], **params)

    z_sc[...] = z_new
    v_sc[...] = v_new
    i_sc[...] = i_new
    rho_sc[...] = rho_new
    zs_ref[0] = z_new.astype(zs_ref.dtype)

    @pl.when(t == pl.num_programs(1) - 1)
    def _():
        zf_ref[...] = z_sc[...].astype(zf_ref.dtype)
        vf_ref[...] = v_sc[...].astype(vf_ref.dtype)
        if_ref[...] = i_sc[...].astype(if_ref.dtype)
        rhof_ref[...] = rho_sc[...].astype(rhof_ref.dtype)


# ----------------------------- weight preparation (call ONCE) -----------------
def prepare_weights(input_weights, recurrent_weights, g_coupling, dtype=None):
    """Zero-pad weights so every matmul operand is (128,128)-aligned.

    Call ONCE outside any step / time loop.  dtype=jnp.bfloat16 halves weight
    HBM traffic (accumulation stays f32; v stays f32 for the coupling matmul).
    """
    H, N_in = input_weights.shape
    assert recurrent_weights.shape == (H, H) and g_coupling.shape == (H, H)
    H_pad = _round_up(H, _LANE)
    N_pad = _round_up(N_in, _LANE)
    w_in = _pad_to(input_weights, (H_pad, N_pad))
    w_rec = _pad_to(recurrent_weights, (H_pad, H_pad))
    g = _pad_to(g_coupling, (H_pad, H_pad))
    if dtype is not None:
        w_in, w_rec, g = w_in.astype(dtype), w_rec.astype(dtype), g.astype(dtype)
    return w_in, w_rec, g


def _weight_bytes(ws):
    return sum(int(w.size) * jnp.dtype(w.dtype).itemsize for w in ws)


# ----------------------------- single step ------------------------------------
def lif_mc_refrac_step_prepared(x, state, prepared_weights, *, max_tile_b=None):
    """One LIFMCRefracCell step given prepare_weights() output."""
    z, v, i, rho = state
    B, N_in = x.shape
    H = z.shape[-1]
    w_in_p, w_rec_p, g_p = prepared_weights
    H_pad, N_pad = w_in_p.shape
    assert w_rec_p.shape == (H_pad, H_pad) and g_p.shape == (H_pad, H_pad)
    assert H_pad >= H and N_pad >= N_in

    itemsize = jnp.dtype(x.dtype).itemsize
    w_bytes = _weight_bytes(prepared_weights)
    per_row_bytes = (N_pad + 8 * H_pad) * itemsize        # x + 4 state in + 4 out
    tile_b, b_full, budget = _choose_tile_b(B, per_row_bytes, w_bytes, max_tile_b)
    grid = (b_full // tile_b,)

    dt = x.dtype
    x_p = _pad_to(x, (b_full, N_pad))
    z_p = _pad_to(jnp.asarray(z, dt), (b_full, H_pad))
    v_p = _pad_to(jnp.asarray(v, dt), (b_full, H_pad))
    i_p = _pad_to(jnp.asarray(i, dt), (b_full, H_pad))
    rho_p = _pad_to(jnp.asarray(rho, dt), (b_full, H_pad))

    x_spec = pl.BlockSpec((tile_b, N_pad), lambda b: (b, 0))
    s_spec = pl.BlockSpec((tile_b, H_pad), lambda b: (b, 0))
    w_in_spec = pl.BlockSpec((H_pad, N_pad), lambda b: (0, 0))   # VMEM-resident
    w_sq_spec = pl.BlockSpec((H_pad, H_pad), lambda b: (0, 0))   # VMEM-resident

    out_sds = jax.ShapeDtypeStruct((b_full, H_pad), dt)

    cost = pl.CostEstimate(
        flops=2 * b_full * H_pad * (N_pad + 2 * H_pad),
        transcendentals=0,
        bytes_accessed=w_bytes + (b_full * N_pad + 8 * b_full * H_pad) * itemsize)

    vmem_limit = int(min(budget,
                         max(2 * w_bytes + 2 * tile_b * per_row_bytes + (4 << 20),
                             32 << 20)))

    kernel = functools.partial(_lif_mc_refrac_step_kernel, **_PARAMS)

    z_o, v_o, i_o, rho_o = pl.pallas_call(
        kernel,
        out_shape=(out_sds,) * 4,
        grid=grid,
        in_specs=[x_spec, s_spec, s_spec, s_spec, s_spec,
                  w_in_spec, w_sq_spec, w_sq_spec],
        out_specs=(s_spec, s_spec, s_spec, s_spec),
        input_output_aliases={1: 0, 2: 1, 3: 2, 4: 3},   # in-place state update
        compiler_params=pltpu.CompilerParams(
            dimension_semantics=("parallel",),
            vmem_limit_bytes=vmem_limit),
        cost_estimate=cost,
    )(x_p, z_p, v_p, i_p, rho_p, w_in_p, w_rec_p, g_p)

    z_out = z_o[:B, :H]
    return z_out, (z_out, v_o[:B, :H], i_o[:B, :H], rho_o[:B, :H])


# ----------------------------- fused time loop --------------------------------
def lif_mc_refrac_sequence_prepared(xs, state, prepared_weights, *,
                                    max_tile_b=None):
    """Run T LIFMCRefracCell steps in ONE kernel (state in VMEM scratch).

    xs: [T, B, N_in].  Returns (zs [T, B, H], final_state).
    Weights are read from HBM once per sequence; v/i/rho never round-trip HBM
    between timesteps.
    """
    z, v, i, rho = state
    T, B, N_in = xs.shape
    H = z.shape[-1]
    w_in_p, w_rec_p, g_p = prepared_weights
    H_pad, N_pad = w_in_p.shape
    assert H_pad >= H and N_pad >= N_in

    itemsize = jnp.dtype(xs.dtype).itemsize
    w_bytes = _weight_bytes(prepared_weights)
    # x + zs out + 4 state in + 4 final out (+ 4 f32 scratch rows)
    per_row_bytes = (N_pad + 9 * H_pad) * itemsize + 4 * H_pad * 4
    tile_b, b_full, budget = _choose_tile_b(B, per_row_bytes, w_bytes, max_tile_b)
    grid = (b_full // tile_b, T)

    dt = xs.dtype
    xs_p = _pad_to(xs, (T, b_full, N_pad))
    z_p = _pad_to(jnp.asarray(z, dt), (b_full, H_pad))
    v_p = _pad_to(jnp.asarray(v, dt), (b_full, H_pad))
    i_p = _pad_to(jnp.asarray(i, dt), (b_full, H_pad))
    rho_p = _pad_to(jnp.asarray(rho, dt), (b_full, H_pad))

    x_spec = pl.BlockSpec((1, tile_b, N_pad), lambda b, t: (t, b, 0))
    s_in_spec = pl.BlockSpec((tile_b, H_pad), lambda b, t: (b, 0))
    w_in_spec = pl.BlockSpec((H_pad, N_pad), lambda b, t: (0, 0))
    w_sq_spec = pl.BlockSpec((H_pad, H_pad), lambda b, t: (0, 0))
    zs_spec = pl.BlockSpec((1, tile_b, H_pad), lambda b, t: (t, b, 0))
    s_out_spec = pl.BlockSpec((tile_b, H_pad), lambda b, t: (b, 0))

    out_shapes = (jax.ShapeDtypeStruct((T, b_full, H_pad), dt),
                  jax.ShapeDtypeStruct((b_full, H_pad), dt),
                  jax.ShapeDtypeStruct((b_full, H_pad), dt),
                  jax.ShapeDtypeStruct((b_full, H_pad), dt),
                  jax.ShapeDtypeStruct((b_full, H_pad), dt))

    cost = pl.CostEstimate(
        flops=2 * T * b_full * H_pad * (N_pad + 2 * H_pad),
        transcendentals=0,
        bytes_accessed=w_bytes + (T * b_full * (N_pad + H_pad)
                                  + 8 * b_full * H_pad) * itemsize)

    vmem_limit = int(min(budget,
                         max(2 * w_bytes + 2 * tile_b * per_row_bytes + (4 << 20),
                             32 << 20)))

    kernel = functools.partial(_lif_mc_refrac_seq_kernel, **_PARAMS)

    zs, zf, vf, i_f, rhof = pl.pallas_call(
        kernel,
        out_shape=out_shapes,
        grid=grid,
        in_specs=[x_spec, s_in_spec, s_in_spec, s_in_spec, s_in_spec,
                  w_in_spec, w_sq_spec, w_sq_spec],
        out_specs=(zs_spec, s_out_spec, s_out_spec, s_out_spec, s_out_spec),
        scratch_shapes=[pltpu.VMEM((tile_b, H_pad), jnp.float32)] * 4,
        compiler_params=pltpu.CompilerParams(
            dimension_semantics=("parallel", "arbitrary"),
            vmem_limit_bytes=vmem_limit),
        cost_estimate=cost,
    )(xs_p, z_p, v_p, i_p, rho_p, w_in_p, w_rec_p, g_p)

    return zs[:, :B, :H], (zf[:B, :H], vf[:B, :H], i_f[:B, :H], rhof[:B, :H])


# ----------------------------- module-style wrapper ----------------------------
def lif_mc_refrac_cell(x, state, input_weights, recurrent_weights, g_coupling,
                       weights_dtype=None):
    """One LIFMCRefracCell step from raw [H, N_in] / [H, H] weights.

    For repeated stepping, call prepare_weights() once and use
    lif_mc_refrac_step_prepared() (or lif_mc_refrac_sequence_prepared() for a
    whole sequence) inside the loop.
    """
    prepared = prepare_weights(input_weights, recurrent_weights, g_coupling,
                               dtype=weights_dtype)
    return lif_mc_refrac_step_prepared(x, state, prepared)


# ----------------------------- reference (pure JAX) ----------------------------
def _reference(x, state, w_in, w_rec, g):
    hp = lax.Precision.HIGHEST
    z, v, i, rho = state
    dv = DT * TAU_MEM_INV * ((V_LEAK - v) + i)
    v_decayed = v + dv + jnp.matmul(v, g.T, precision=hp)
    i_decayed = i - DT * TAU_SYN_INV * i
    z_new = (v_decayed - V_TH > 0.0).astype(x.dtype)
    v_new = (1.0 - z_new) * v_decayed + z_new * V_RESET
    i_new = (i_decayed + jnp.matmul(x, w_in.T, precision=hp)
             + jnp.matmul(z, w_rec.T, precision=hp))
    refrac = (rho > 0.0).astype(x.dtype)
    v_f = (1.0 - refrac) * v_new + refrac * v
    z_f = (1.0 - refrac) * z_new
    rho_new = (1.0 - z_f) * jnp.maximum(rho - refrac, 0.0) + z_f * RHO_RESET
    return z_f, (z_f, v_f, i_new, rho_new)


def _reference_sequence(xs, state, w_in, w_rec, g):
    def body(carry, x_t):
        z_t, new_state = _reference(x_t, carry, w_in, w_rec, g)
        return new_state, z_t
    final_state, zs = lax.scan(body, state, xs)
    return zs, final_state


def _check(pairs, atol=1e-4):
    for a, b in pairs:
        assert a.shape == b.shape, (a.shape, b.shape)
        assert jnp.allclose(a, b, atol=atol, rtol=1e-4), (
            float(jnp.max(jnp.abs(a - b))))


# ----------------------------- main --------------------------------------------
if __name__ == "__main__":
    key = jax.random.PRNGKey(0)
    k = jax.random.split(key, 8)

    # -------- test 1: module-default small shapes (B=2, N_in=16, H=32) --------
    B, N_IN, H = 2, 16, 32
    w_in = jax.random.normal(k[0], (H, N_IN), jnp.float32) / jnp.sqrt(N_IN)
    w_rec = jax.random.normal(k[1], (H, H), jnp.float32) / jnp.sqrt(H)
    g = jax.random.normal(k[2], (H, H), jnp.float32) / jnp.sqrt(H)
    x = jax.random.normal(k[3], (B, N_IN), jnp.float32)
    state0 = (
        jnp.zeros((B, H), jnp.float32),
        V_LEAK + 0.9 * jax.random.uniform(k[4], (B, H), jnp.float32),
        jax.random.normal(k[5], (B, H), jnp.float32),
        (jax.random.uniform(k[6], (B, H), jnp.float32) > 0.7).astype(jnp.float32) * 3.0,
    )

    prepared = prepare_weights(w_in, w_rec, g)           # f32: bitwise-tight check
    z_out, s_out = lif_mc_refrac_step_prepared(x, state0, prepared)
    jax.block_until_ready((z_out,) + s_out)

    z_r, s_r = _reference(x, state0, w_in, w_rec, g)
    _check([(z_out, z_r)] + list(zip(s_out, s_r)))

    # -------- test 2: tiled / padded path (B=19 non-divisible, H=40, grid>1) --
    B2, N2, H2 = 19, 20, 40
    k2 = jax.random.split(k[7], 8)
    w_in2 = jax.random.normal(k2[0], (H2, N2), jnp.float32) / jnp.sqrt(N2)
    w_rec2 = jax.random.normal(k2[1], (H2, H2), jnp.float32) / jnp.sqrt(H2)
    g2 = jax.random.normal(k2[2], (H2, H2), jnp.float32) / jnp.sqrt(H2)
    x2 = jax.random.normal(k2[3], (B2, N2), jnp.float32)
    state2 = (
        (jax.random.uniform(k2[4], (B2, H2)) > 0.5).astype(jnp.float32),
        0.9 * jax.random.uniform(k2[5], (B2, H2), jnp.float32),
        jax.random.normal(k2[6], (B2, H2), jnp.float32),
        (jax.random.uniform(k2[7], (B2, H2)) > 0.6).astype(jnp.float32) * 2.0,
    )
    prepared2 = prepare_weights(w_in2, w_rec2, g2)
    z_out2, s_out2 = lif_mc_refrac_step_prepared(x2, state2, prepared2,
                                                 max_tile_b=8)   # forces grid=3
    jax.block_until_ready(z_out2)
    z_r2, s_r2 = _reference(x2, state2, w_in2, w_rec2, g2)
    _check([(z_out2, z_r2)] + list(zip(s_out2, s_r2)))

    # -------- test 3: fused time loop (T=6, B=20 -> 2 batch tiles) ------------
    T, B3, N3, H3 = 6, 20, 16, 32
    k3 = jax.random.split(jax.random.PRNGKey(1), 8)
    w_in3 = jax.random.normal(k3[0], (H3, N3), jnp.float32) / jnp.sqrt(N3)
    w_rec3 = jax.random.normal(k3[1], (H3, H3), jnp.float32) / jnp.sqrt(H3)
    g3 = jax.random.normal(k3[2], (H3, H3), jnp.float32) / jnp.sqrt(H3)
    xs = jax.random.normal(k3[3], (T, B3, N3), jnp.float32)
    state3 = (
        jnp.zeros((B3, H3), jnp.float32),
        0.9 * jax.random.uniform(k3[4], (B3, H3), jnp.float32),
        jax.random.normal(k3[5], (B3, H3), jnp.float32),
        (jax.random.uniform(k3[6], (B3, H3)) > 0.7).astype(jnp.float32) * 3.0,
    )
    prepared3 = prepare_weights(w_in3, w_rec3, g3)
    zs_k, sf_k = lif_mc_refrac_sequence_prepared(xs, state3, prepared3)
    jax.block_until_ready(zs_k)
    zs_r, sf_r = _reference_sequence(xs, state3, w_in3, w_rec3, g3)
    _check([(zs_k, zs_r)] + list(zip(sf_k, sf_r)))

    print("KERNEL_OK")
</pallas_src>

<mosaic_0001>
module attributes {stable_mosaic.version = 11 : i64} {
  func.func @_lif_mc_refrac_step_kernel(%arg0: i32, %arg1: memref<8x128xf32, #tpu.memory_space<vmem>>, %arg2: memref<8x128xf32, #tpu.memory_space<vmem>>, %arg3: memref<8x128xf32, #tpu.memory_space<vmem>>, %arg4: memref<8x128xf32, #tpu.memory_space<vmem>>, %arg5: memref<8x128xf32, #tpu.memory_space<vmem>>, %arg6: memref<128x128xf32, #tpu.memory_space<vmem>>, %arg7: memref<128x128xf32, #tpu.memory_space<vmem>>, %arg8: memref<128x128xf32, #tpu.memory_space<vmem>>, %arg9: memref<8x128xf32, #tpu.memory_space<vmem>>, %arg10: memref<8x128xf32, #tpu.memory_space<vmem>>, %arg11: memref<8x128xf32, #tpu.memory_space<vmem>>, %arg12: memref<8x128xf32, #tpu.memory_space<vmem>>) attributes {dimension_semantics = [#tpu.dimension_semantics<parallel>], iteration_bounds = array<i64: 1>, scalar_prefetch = 0 : i64, scratch_operands = 0 : i64, tpu.core_type = #tpu.core_type<tc>, window_params = [{transform_indices = @transform_0, window_bounds = array<i64: 8, 128>}, {transform_indices = @transform_1, window_bounds = array<i64: 8, 128>}, {transform_indices = @transform_2, window_bounds = array<i64: 8, 128>}, {transform_indices = @transform_3, window_bounds = array<i64: 8, 128>}, {transform_indices = @transform_4, window_bounds = array<i64: 8, 128>}, {pipeline_mode = #tpu.pipeline_mode<synchronous>, transform_indices = @transform_5, window_bounds = array<i64: 128, 128>}, {pipeline_mode = #tpu.pipeline_mode<synchronous>, transform_indices = @transform_6, window_bounds = array<i64: 128, 128>}, {pipeline_mode = #tpu.pipeline_mode<synchronous>, transform_indices = @transform_7, window_bounds = array<i64: 128, 128>}, {transform_indices = @transform_8, window_bounds = array<i64: 8, 128>}, {transform_indices = @transform_9, window_bounds = array<i64: 8, 128>}, {transform_indices = @transform_10, window_bounds = array<i64: 8, 128>}, {transform_indices = @transform_11, window_bounds = array<i64: 8, 128>}]} {
    %c0 = arith.constant 0 : index
    %c0_0 = arith.constant 0 : index
    %0 = vector.load %arg1[%c0, %c0_0] : memref<8x128xf32, #tpu.memory_space<vmem>>, vector<8x128xf32>
    %c0_1 = arith.constant 0 : index
    %c0_2 = arith.constant 0 : index
    %1 = vector.load %arg2[%c0_1, %c0_2] : memref<8x128xf32, #tpu.memory_space<vmem>>, vector<8x128xf32>
    %c0_3 = arith.constant 0 : index
    %c0_4 = arith.constant 0 : index
    %2 = vector.load %arg3[%c0_3, %c0_4] : memref<8x128xf32, #tpu.memory_space<vmem>>, vector<8x128xf32>
    %c0_5 = arith.constant 0 : index
    %c0_6 = arith.constant 0 : index
    %3 = vector.load %arg4[%c0_5, %c0_6] : memref<8x128xf32, #tpu.memory_space<vmem>>, vector<8x128xf32>
    %c0_7 = arith.constant 0 : index
    %c0_8 = arith.constant 0 : index
    %4 = vector.load %arg5[%c0_7, %c0_8] : memref<8x128xf32, #tpu.memory_space<vmem>>, vector<8x128xf32>
    %c0_9 = arith.constant 0 : index
    %c0_10 = arith.constant 0 : index
    %5 = vector.load %arg6[%c0_9, %c0_10] : memref<128x128xf32, #tpu.memory_space<vmem>>, vector<128x128xf32>
    %c0_11 = arith.constant 0 : index
    %c0_12 = arith.constant 0 : index
    %6 = vector.load %arg7[%c0_11, %c0_12] : memref<128x128xf32, #tpu.memory_space<vmem>>, vector<128x128xf32>
    %c0_13 = arith.constant 0 : index
    %c0_14 = arith.constant 0 : index
    %7 = vector.load %arg8[%c0_13, %c0_14] : memref<128x128xf32, #tpu.memory_space<vmem>>, vector<128x128xf32>
    %cst = arith.constant dense<0.000000e+00> : vector<8x128xf32>
    %8 = tpu.matmul %2, %7, %cst {dimension_numbers = #tpu.dot_dimension_numbers<[1], [1], [0], [0], [0, 0, 1, 0], [], []>} : vector<8x128xf32>, vector<128x128xf32>, vector<8x128xf32> -> vector<8x128xf32>
    %cst_15 = arith.constant 0.000000e+00 : f32
    %9 = vector.broadcast %cst_15 : f32 to vector<8x128xf32>
    %10 = arith.subf %9, %2 : vector<8x128xf32>
    %11 = arith.addf %10, %3 : vector<8x128xf32>
    %cst_16 = arith.constant 1.000000e-01 : f32
    %12 = vector.broadcast %cst_16 : f32 to vector<8x128xf32>
    %13 = arith.mulf %12, %11 : vector<8x128xf32>
    %14 = arith.addf %2, %13 : vector<8x128xf32>
    %15 = arith.addf %14, %8 : vector<8x128xf32>
    %cst_17 = arith.constant 8.000000e-01 : f32
    %16 = vector.broadcast %cst_17 : f32 to vector<8x128xf32>
    %17 = arith.mulf %3, %16 : vector<8x128xf32>
    %cst_18 = arith.constant dense<0.000000e+00> : vector<8x128xf32>
    %18 = tpu.matmul %0, %5, %cst_18 {dimension_numbers = #tpu.dot_dimension_numbers<[1], [1], [0], [0], [0, 0, 1, 0], [], []>} : vector<8x128xf32>, vector<128x128xf32>, vector<8x128xf32> -> vector<8x128xf32>
    %cst_19 = arith.constant dense<0.000000e+00> : vector<8x128xf32>
    %19 = tpu.matmul %1, %6, %cst_19 {dimension_numbers = #tpu.dot_dimension_numbers<[1], [1], [0], [0], [0, 0, 1, 0], [], []>} : vector<8x128xf32>, vector<128x128xf32>, vector<8x128xf32> -> vector<8x128xf32>
    %20 = arith.addf %17, %18 : vector<8x128xf32>
    %21 = arith.addf %20, %19 : vector<8x128xf32>
    %cst_20 = arith.constant 1.000000e+00 : f32
    %22 = vector.broadcast %cst_20 : f32 to vector<8x128xf32>
    %23 = arith.cmpf ogt, %15, %22 : vector<8x128xf32>
    %cst_21 = arith.constant 0.000000e+00 : f32
    %24 = vector.broadcast %cst_21 : f32 to vector<8x128xf32>
    %25 = arith.cmpf ogt, %4, %24 : vector<8x128xf32>
    %cst_22 = arith.constant dense<true> : vector<8x128xi1>
    %26 = arith.xori %25, %cst_22 : vector<8x128xi1>
    %27 = arith.andi %23, %26 : vector<8x128xi1>
    %cst_23 = arith.constant 0.000000e+00 : f32
    %28 = vector.broadcast %cst_23 : f32 to vector<8x128xf32>
    %29 = arith.select %23, %28, %15 : vector<8x128xi1>, vector<8x128xf32>
    %30 = arith.select %25, %2, %29 : vector<8x128xi1>, vector<8x128xf32>
    %31 = arith.extui %25 : vector<8x128xi1> to vector<8x128xi32>
    %32 = arith.sitofp %31 : vector<8x128xi32> to vector<8x128xf32>
    %33 = arith.subf %4, %32 : vector<8x128xf32>
    %cst_24 = arith.constant 0.000000e+00 : f32
    %34 = vector.broadcast %cst_24 : f32 to vector<8x128xf32>
    %35 = arith.maximumf %33, %34 : vector<8x128xf32>
    %cst_25 = arith.constant 5.000000e+00 : f32
    %36 = vector.broadcast %cst_25 : f32 to vector<8x128xf32>
    %37 = arith.select %27, %36, %35 : vector<8x128xi1>, vector<8x128xf32>
    %38 = arith.extui %27 : vector<8x128xi1> to vector<8x128xi32>
    %39 = arith.sitofp %38 : vector<8x128xi32> to vector<8x128xf32>
    %c0_26 = arith.constant 0 : index
    %c0_27 = arith.constant 0 : index
    %40 = vector.load %arg9[%c0_26, %c0_27] : memref<8x128xf32, #tpu.memory_space<vmem>>, vector<8x128xf32>
    tpu.vector_store %arg9[%c0_26, %c0_27], %39 {strides = array<i32>} : memref<8x128xf32, #tpu.memory_space<vmem>>, vector<8x128xf32>,
    %c0_28 = arith.constant 0 : index
    %c0_29 = arith.constant 0 : index
    %41 = vector.load %arg10[%c0_28, %c0_29] : memref<8x128xf32, #tpu.memory_space<vmem>>, vector<8x128xf32>
    tpu.vector_store %arg10[%c0_28, %c0_29], %30 {strides = array<i32>} : memref<8x128xf32, #tpu.memory_space<vmem>>, vector<8x128xf32>,
    %c0_30 = arith.constant 0 : index
    %c0_31 = arith.constant 0 : index
    %42 = vector.load %arg11[%c0_30, %c0_31] : memref<8x128xf32, #tpu.memory_space<vmem>>, vector<8x128xf32>
    tpu.vector_store %arg11[%c0_30, %c0_31], %21 {strides = array<i32>} : memref<8x128xf32, #tpu.memory_space<vmem>>, vector<8x128xf32>,
    %c0_32 = arith.constant 0 : index
    %c0_33 = arith.constant 0 : index
    %43 = vector.load %arg12[%c0_32, %c0_33] : memref<8x128xf32, #tpu.memory_space<vmem>>, vector<8x128xf32>
    tpu.vector_store %arg12[%c0_32, %c0_33], %37 {strides = array<i32>} : memref<8x128xf32, #tpu.memory_space<vmem>>, vector<8x128xf32>,
    return
  }
  func.func @transform_0(%arg0: i32) -> (i32, i32) {
    %c0_i32 = arith.constant 0 : i32
    %c0_i32_0 = arith.constant 0 : i32
    return %arg0, %c0_i32 : i32, i32
  }
  func.func @transform_1(%arg0: i32) -> (i32, i32) {
    %c0_i32 = arith.constant 0 : i32
    %c0_i32_0 = arith.constant 0 : i32
    return %arg0, %c0_i32 : i32, i32
  }
  func.func @transform_2(%arg0: i32) -> (i32, i32) {
    %c0_i32 = arith.constant 0 : i32
    %c0_i32_0 = arith.constant 0 : i32
    return %arg0, %c0_i32 : i32, i32
  }
  func.func @transform_3(%arg0: i32) -> (i32, i32) {
    %c0_i32 = arith.constant 0 : i32
    %c0_i32_0 = arith.constant 0 : i32
    return %arg0, %c0_i32 : i32, i32
  }
  func.func @transform_4(%arg0: i32) -> (i32, i32) {
    %c0_i32 = arith.constant 0 : i32
    %c0_i32_0 = arith.constant 0 : i32
    return %arg0, %c0_i32 : i32, i32
  }
  func.func @transform_5(%arg0: i32) -> (i32, i32) {
    %c0_i32 = arith.constant 0 : i32
    %c0_i32_0 = arith.constant 0 : i32
    %c0_i32_1 = arith.constant 0 : i32
    return %c0_i32, %c0_i32_0 : i32, i32
  }
  func.func @transform_6(%arg0: i32) -> (i32, i32) {
    %c0_i32 = arith.constant 0 : i32
    %c0_i32_0 = arith.constant 0 : i32
    %c0_i32_1 = arith.constant 0 : i32
    return %c0_i32, %c0_i32_0 : i32, i32
  }
  func.func @transform_7(%arg0: i32) -> (i32, i32) {
    %c0_i32 = arith.constant 0 : i32
    %c0_i32_0 = arith.constant 0 : i32
    %c0_i32_1 = arith.constant 0 : i32
    return %c0_i32, %c0_i32_0 : i32, i32
  }
  func.func @transform_8(%arg0: i32) -> (i32, i32) {
    %c0_i32 = arith.constant 0 : i32
    %c0_i32_0 = arith.constant 0 : i32
    return %arg0, %c0_i32 : i32, i32
  }
  func.func @transform_9(%arg0: i32) -> (i32, i32) {
    %c0_i32 = arith.constant 0 : i32
    %c0_i32_0 = arith.constant 0 : i32
    return %arg0, %c0_i32 : i32, i32
  }
  func.func @transform_10(%arg0: i32) -> (i32, i32) {
    %c0_i32 = arith.constant 0 : i32
    %c0_i32_0 = arith.constant 0 : i32
    return %arg0, %c0_i32 : i32, i32
  }
  func.func @transform_11(%arg0: i32) -> (i32, i32) {
    %c0_i32 = arith.constant 0 : i32
    %c0_i32_0 = arith.constant 0 : i32
    return %arg0, %c0_i32 : i32, i32
  }
}

</mosaic_0001>

<llo_original>
// kernel: tpu_custom_call.1
$region0: #{tpu_custom_call.1}
  #allocation0 [shape = 'u32[]', space=smem, size = 0x4, offset = 0x4, fixed_abs, tag = 'smem constant byte address 0x4 - core index']
  #allocation1 [shape = 'u32[144,128]{1,0:T(1,128)}', space=vmem, size = 0x12000, scoped, tag = 'internal scratch']
  %s0 = inlined_call_operand.vmem [shape: f32[8,128], index: 0, kind: input, shape index: {}]
  %s1 = inlined_call_operand.hbm [shape: f32[8,128], index: 1, kind: input, shape index: {}, may-alias: {1,8}]
  %s2 = inlined_call_operand.hbm [shape: f32[8,128], index: 2, kind: input, shape index: {}, may-alias: {2,9}]
  %s3 = inlined_call_operand.hbm [shape: f32[8,128], index: 3, kind: input, shape index: {}, may-alias: {3,10}]
  %s4 = inlined_call_operand.hbm [shape: f32[8,128], index: 4, kind: input, shape index: {}, may-alias: {4,11}]
  %s5 = inlined_call_operand.hbm [shape: f32[128,128], index: 5, kind: input, shape index: {}]
  %s6 = inlined_call_operand.hbm [shape: f32[128,128], index: 6, kind: input, shape index: {}]
  %s7 = inlined_call_operand.hbm [shape: f32[128,128], index: 7, kind: input, shape index: {}]
  %s8 = inlined_call_operand.hbm [shape: f32[8,128], index: 8, kind: output, shape index: {0}, may-alias: {1,8}]
  %s9 = inlined_call_operand.hbm [shape: f32[8,128], index: 9, kind: output, shape index: {1}, may-alias: {2,9}]
  %s10 = inlined_call_operand.hbm [shape: f32[8,128], index: 10, kind: output, shape index: {2}, may-alias: {3,10}]
  %s11 = inlined_call_operand.hbm [shape: f32[8,128], index: 11, kind: output, shape index: {3}, may-alias: {4,11}]
  %12 = xla_tuple %s8, %s9, %s10, %s11
  %s13 = sld [smem:[#allocation0]]
  $region94: #{tpu_custom_call.1} parent=0
    _
  %s15 = ssub.s32 1, %s13
  %s16 = scalar_select 0, %s15, %s13
  $region1: #{tpu_custom_call.1} parent=0
    #allocation2 [shape = 'u8[4096]{0}', space=vmem, size = 0x1000, scoped, tag = 'input window, operand 1, single buffered']
    #allocation3 [shape = 's32[1]{0}', space=sflag, size = 0x4, scoped, tag = 'scoped memory for tpu_custom_call.1']
    #allocation4 [shape = 's32[1]{0}', space=sflag, size = 0x4, scoped, tag = 'scoped memory for tpu_custom_call.1']
    #allocation5 [shape = 'u8[4096]{0}', space=vmem, size = 0x1000, scoped, tag = 'input window, operand 2, single buffered']
    #allocation6 [shape = 's32[1]{0}', space=sflag, size = 0x4, scoped, tag = 'scoped memory for tpu_custom_call.1']
    #allocation7 [shape = 'u8[4096]{0}', space=vmem, size = 0x1000, scoped, tag = 'input window, operand 3, single buffered']
    #allocation8 [shape = 'u8[4096]{0}', space=vmem, size = 0x1000, scoped, tag = 'input window, operand 4, single buffered']
    #allocation9 [shape = 's32[1]{0}', space=sflag, size = 0x4, scoped, tag = 'scoped memory for tpu_custom_call.1']
    #allocation10 [shape = 'u8[65536]{0}', space=vmem, size = 0x10000, scoped, tag = 'input window, operand 5, single buffered']
    #allocation11 [shape = 'u8[65536]{0}', space=vmem, size = 0x10000, scoped, tag = 'input window, operand 6, single buffered']
    #allocation12 [shape = 's32[1]{0}', space=sflag, size = 0x4, scoped, tag = 'scoped memory for tpu_custom_call.1']
    #allocation13 [shape = 'u8[65536]{0}', space=vmem, size = 0x10000, scoped, tag = 'input window, operand 7, single buffered']
    #allocation14 [shape = 'u8[4096]{0}', space=vmem, size = 0x1000, scoped, tag = 'output window, operand 0, single buffered']
    #allocation15 [shape = 'u8[4096]{0}', space=vmem, size = 0x1000, scoped, tag = 'output window, operand 1, single buffered']
    #allocation16 [shape = 's32[1]{0}', space=sflag, size = 0x4, scoped, tag = 'scoped memory for tpu_custom_call.1']
    #allocation17 [shape = 'u8[4096]{0}', space=vmem, size = 0x1000, scoped, tag = 'output window, operand 2, single buffered']
    #allocation18 [shape = 'u8[4096]{0}', space=vmem, size = 0x1000, scoped, tag = 'output window, operand 3, single buffered']
    #allocation19 [shape = 's32[1]{0}', space=sflag, size = 0x4, scoped, tag = 'scoped memory for tpu_custom_call.1']
    %17 = vsyncpa [#allocation3], 0
    %18 = vsyncpa [#allocation6], 0
    %19 = vsyncpa [#allocation9], 0
    %20 = vsyncpa [#allocation12], 0
    %21 = vsyncpa [#allocation4], 0
    %22 = vsyncpa [#allocation16], 0
    %23 = vsyncpa [#allocation19], 0
    // Predicated region
    $region2: #{tpu_custom_call.1} parent=1 // pred_check
      _
    $region3: #{tpu_custom_call.1} parent=1 // pred_check_branch
      %25 = sbr.rel (0) target = $region5
    $region4: #{tpu_custom_call.1} parent=1 // pred_region
      _
    $region5: #{tpu_custom_call.1} parent=1 // pred_fallthru
      _
    // Predicated region
    $region6: #{tpu_custom_call.1} parent=1 // pred_check
      _
    $region7: #{tpu_custom_call.1} parent=1 // pred_check_branch
      %27 = sbr.rel (0) target = $region9
    $region8: #{tpu_custom_call.1} parent=1 // pred_region
      %s29 = ssub.s32 128, 128
      %30 = vsyncadd [#allocation3], %s29
      %s32 = sshll.u32 [#allocation2], 4
      %s33 = int_to_ptr.vmem [resolvable:$true] %s32
      %35 = dma.hbm_to_vmem [thread:$0]  %s1, 128, %s33, [#allocation3]
    $region9: #{tpu_custom_call.1} parent=1 // pred_fallthru
      _
    // Predicated region
    $region10: #{tpu_custom_call.1} parent=1 // pred_check
      _
    $region11: #{tpu_custom_call.1} parent=1 // pred_check_branch
      %37 = sbr.rel (0) target = $region13
    $region12: #{tpu_custom_call.1} parent=1 // pred_region
      %s39 = ssub.s32 128, 128
      %40 = vsyncadd [#allocation6], %s39
      %s42 = sshll.u32 [#allocation5], 4
      %s43 = int_to_ptr.vmem [resolvable:$true] %s42
      %45 = dma.hbm_to_vmem [thread:$0]  %s2, 128, %s43, [#allocation6]
    $region13: #{tpu_custom_call.1} parent=1 // pred_fallthru
      _
    // Predicated region
    $region14: #{tpu_custom_call.1} parent=1 // pred_check
      _
    $region15: #{tpu_custom_call.1} parent=1 // pred_check_branch
      %47 = sbr.rel (0) target = $region17
    $region16: #{tpu_custom_call.1} parent=1 // pred_region
      %s49 = ssub.s32 128, 128
      %50 = vsyncadd [#allocation6], %s49
      %s52 = sshll.u32 [#allocation7], 4
      %s53 = int_to_ptr.vmem [resolvable:$true] %s52
      %55 = dma.hbm_to_vmem [thread:$0]  %s3, 128, %s53, [#allocation6]
    $region17: #{tpu_custom_call.1} parent=1 // pred_fallthru
      _
    // Predicated region
    $region18: #{tpu_custom_call.1} parent=1 // pred_check
      _
    $region19: #{tpu_custom_call.1} parent=1 // pred_check_branch
      %57 = sbr.rel (0) target = $region21
    $region20: #{tpu_custom_call.1} parent=1 // pred_region
      %s59 = ssub.s32 128, 128
      %60 = vsyncadd [#allocation9], %s59
      %s62 = sshll.u32 [#allocation8], 4
      %s63 = int_to_ptr.vmem [resolvable:$true] %s62
      %65 = dma.hbm_to_vmem [thread:$0]  %s4, 128, %s63, [#allocation9]
    $region21: #{tpu_custom_call.1} parent=1 // pred_fallthru
      _
    // Predicated region
    $region22: #{tpu_custom_call.1} parent=1 // pred_check
      _
    $region23: #{tpu_custom_call.1} parent=1 // pred_check_branch
      %67 = sbr.rel (0) target = $region25
    $region24: #{tpu_custom_call.1} parent=1 // pred_region
      %s69 = ssub.s32 2048, 2048
      %70 = vsyncadd [#allocation9], %s69
      %s71 = sshll.u32 [#allocation10], 4
      %s72 = int_to_ptr.vmem [resolvable:$true] %s71
      %77 = dma.hbm_to_vmem [thread:$0]  %s5, 2048, %s72, [#allocation9], 128, 128, 8
    $region25: #{tpu_custom_call.1} parent=1 // pred_fallthru
      _
    // Predicated region
    $region26: #{tpu_custom_call.1} parent=1 // pred_check
      _
    $region27: #{tpu_custom_call.1} parent=1 // pred_check_branch
      %79 = sbr.rel (0) target = $region29
    $region28: #{tpu_custom_call.1} parent=1 // pred_region
      %s81 = ssub.s32 2048, 2048
      %82 = vsyncadd [#allocation12], %s81
      %s83 = sshll.u32 [#allocation11], 4
      %s84 = int_to_ptr.vmem [resolvable:$true] %s83
      %89 = dma.hbm_to_vmem [thread:$0]  %s6, 2048, %s84, [#allocation12], 128, 128, 8
    $region29: #{tpu_custom_call.1} parent=1 // pred_fallthru
      _
    // Predicated region
    $region30: #{tpu_custom_call.1} parent=1 // pred_check
      _
    $region31: #{tpu_custom_call.1} parent=1 // pred_check_branch
      %91 = sbr.rel (0) target = $region33
    $region32: #{tpu_custom_call.1} parent=1 // pred_region
      %s93 = ssub.s32 2048, 2048
      %94 = vsyncadd [#allocation12], %s93
      %s95 = sshll.u32 [#allocation13], 4
      %s96 = int_to_ptr.vmem [resolvable:$true] %s95
      %101 = dma.hbm_to_vmem [thread:$0]  %s7, 2048, %s96, [#allocation12], 128, 128, 8
    $region33: #{tpu_custom_call.1} parent=1 // pred_fallthru
      _
    // Predicated region
    $region34: #{tpu_custom_call.1} parent=1 // pred_check
      _
    $region35: #{tpu_custom_call.1} parent=1 // pred_check_branch
      %103 = sbr.rel (0) target = $region37
    $region36: #{tpu_custom_call.1} parent=1 // pred_region
      %104 = dma.done [#allocation3], 128
    $region37: #{tpu_custom_call.1} parent=1 // pred_fallthru
      _
    // Predicated region
    $region38: #{tpu_custom_call.1} parent=1 // pred_check
      _
    $region39: #{tpu_custom_call.1} parent=1 // pred_check_branch
      %106 = sbr.rel (0) target = $region41
    $region40: #{tpu_custom_call.1} parent=1 // pred_region
      %107 = dma.done [#allocation6], 128
    $region41: #{tpu_custom_call.1} parent=1 // pred_fallthru
      _
    // Predicated region
    $region42: #{tpu_custom_call.1} parent=1 // pred_check
      _
    $region43: #{tpu_custom_call.1} parent=1 // pred_check_branch
      %109 = sbr.rel (0) target = $region45
    $region44: #{tpu_custom_call.1} parent=1 // pred_region
      %110 = dma.done [#allocation6], 128
    $region45: #{tpu_custom_call.1} parent=1 // pred_fallthru
      _
    // Predicated region
    $region46: #{tpu_custom_call.1} parent=1 // pred_check
      _
    $region47: #{tpu_custom_call.1} parent=1 // pred_check_branch
      %112 = sbr.rel (0) target = $region49
    $region48: #{tpu_custom_call.1} parent=1 // pred_region
      %113 = dma.done [#allocation9], 128
    $region49: #{tpu_custom_call.1} parent=1 // pred_fallthru
      _
    // Predicated region
    $region50: #{tpu_custom_call.1} parent=1 // pred_check
      _
    $region51: #{tpu_custom_call.1} parent=1 // pred_check_branch
      %115 = sbr.rel (0) target = $region53
    $region52: #{tpu_custom_call.1} parent=1 // pred_region
      %116 = dma.done [#allocation9], 2048
    $region53: #{tpu_custom_call.1} parent=1 // pred_fallthru
      _
    // Predicated region
    $region54: #{tpu_custom_call.1} parent=1 // pred_check
      _
    $region55: #{tpu_custom_call.1} parent=1 // pred_check_branch
      %118 = sbr.rel (0) target = $region57
    $region56: #{tpu_custom_call.1} parent=1 // pred_region
      %119 = dma.done [#allocation12], 2048
    $region57: #{tpu_custom_call.1} parent=1 // pred_fallthru
      _
    // Predicated region
    $region58: #{tpu_custom_call.1} parent=1 // pred_check
      _
    $region59: #{tpu_custom_call.1} parent=1 // pred_check_branch
      %121 = sbr.rel (0) target = $region61
    $region60: #{tpu_custom_call.1} parent=1 // pred_region
      %122 = dma.done [#allocation12], 2048
    $region61: #{tpu_custom_call.1} parent=1 // pred_fallthru
      _
    %v123 = vld [vmem:[%s0] sm:$0xff]
    %v124 = vld [vmem:[#allocation2] sm:$0xff]
    %v125 = vld [vmem:[#allocation5] sm:$0xff]
    %v126 = vld [vmem:[#allocation7] sm:$0xff]
    %v127 = vld [vmem:[#allocation8] sm:$0xff]
    %v128 = vld [vmem:[#allocation10] sm:$0xff]
    %v129 = vld [vmem:[#allocation10 + $0x8] sm:$0xff]
    %v130 = vld [vmem:[#allocation10 + $0x10] sm:$0xff]
    %v131 = vld [vmem:[#allocation10 + $0x18] sm:$0xff]
    %v132 = vld [vmem:[#allocation10 + $0x20] sm:$0xff]
    %v133 = vld [vmem:[#allocation10 + $0x28] sm:$0xff]
    %v134 = vld [vmem:[#allocation10 + $0x30] sm:$0xff]
    %v135 = vld [vmem:[#allocation10 + $0x38] sm:$0xff]
    %v136 = vld [vmem:[#allocation10 + $0x40] sm:$0xff]
    %v137 = vld [vmem:[#allocation10 + $0x48] sm:$0xff]
    %v138 = vld [vmem:[#allocation10 + $0x50] sm:$0xff]
    %v139 = vld [vmem:[#allocation10 + $0x58] sm:$0xff]
    %v140 = vld [vmem:[#allocation10 + $0x60] sm:$0xff]
    %v141 = vld [vmem:[#allocation10 + $0x68] sm:$0xff]
    %v142 = vld [vmem:[#allocation10 + $0x70] sm:$0xff]
    %v143 = vld [vmem:[#allocation10 + $0x78] sm:$0xff]
    %v144 = vld [vmem:[#allocation11] sm:$0xff]
    %v145 = vld [vmem:[#allocation11 + $0x8] sm:$0xff]
    %v146 = vld [vmem:[#allocation11 + $0x10] sm:$0xff]
    %v147 = vld [vmem:[#allocation11 + $0x18] sm:$0xff]
    %v148 = vld [vmem:[#allocation11 + $0x20] sm:$0xff]
    %v149 = vld [vmem:[#allocation11 + $0x28] sm:$0xff]
    %v150 = vld [vmem:[#allocation11 + $0x30] sm:$0xff]
    %v151 = vld [vmem:[#allocation11 + $0x38] sm:$0xff]
    %v152 = vld [vmem:[#allocation11 + $0x40] sm:$0xff]
    %v153 = vld [vmem:[#allocation11 + $0x48] sm:$0xff]
    %v154 = vld [vmem:[#allocation11 + $0x50] sm:$0xff]
    %v155 = vld [vmem:[#allocation11 + $0x58] sm:$0xff]
    %v156 = vld [vmem:[#allocation11 + $0x60] sm:$0xff]
    %v157 = vld [vmem:[#allocation11 + $0x68] sm:$0xff]
    %v158 = vld [vmem:[#allocation11 + $0x70] sm:$0xff]
    %v159 = vld [vmem:[#allocation11 + $0x78] sm:$0xff]
    %v160 = vld [vmem:[#allocation13] sm:$0xff]
    %v161 = vld [vmem:[#allocation13 + $0x8] sm:$0xff]
    %v162 = vld [vmem:[#allocation13 + $0x10] sm:$0xff]
    %v163 = vld [vmem:[#allocation13 + $0x18] sm:$0xff]
    %v164 = vld [vmem:[#allocation13 + $0x20] sm:$0xff]
    %v165 = vld [vmem:[#allocation13 + $0x28] sm:$0xff]
    %v166 = vld [vmem:[#allocation13 + $0x30] sm:$0xff]
    %v167 = vld [vmem:[#allocation13 + $0x38] sm:$0xff]
    %v168 = vld [vmem:[#allocation13 + $0x40] sm:$0xff]
    %v169 = vld [vmem:[#allocation13 + $0x48] sm:$0xff]
    %v170 = vld [vmem:[#allocation13 + $0x50] sm:$0xff]
    %v171 = vld [vmem:[#allocation13 + $0x58] sm:$0xff]
    %v172 = vld [vmem:[#allocation13 + $0x60] sm:$0xff]
    %v173 = vld [vmem:[#allocation13 + $0x68] sm:$0xff]
    %v174 = vld [vmem:[#allocation13 + $0x70] sm:$0xff]
    %v175 = vld [vmem:[#allocation13 + $0x78] sm:$0xff]
    %176 = vmatprep.subr.mxu0 0.0
    %177 = vmatpush1.xpose.msra.mxu0 %v160
    %178 = vmatprep.subr.mxu0 0.0
    %179 = vmatpush1.xpose.msra.mxu0 %v161
    %180 = vmatprep.subr.mxu0 0.0
    %181 = vmatpush1.xpose.msra.mxu0 %v162
    %182 = vmatprep.subr.mxu0 0.0
    %183 = vmatpush1.xpose.msra.mxu0 %v163
    %184 = vmatprep.subr.mxu0 0.0
    %185 = vmatpush1.xpose.msra.mxu0 %v164
    %186 = vmatprep.subr.mxu0 0.0
    %187 = vmatpush1.xpose.msra.mxu0 %v165
    %188 = vmatprep.subr.mxu0 0.0
    %189 = vmatpush1.xpose.msra.mxu0 %v166
    %190 = vmatprep.subr.mxu0 0.0
    %191 = vmatpush1.xpose.msra.mxu0 %v167
    %192 = vmatprep.subr.mxu0 0.0
    %193 = vmatpush1.xpose.msra.mxu0 %v168
    %194 = vmatprep.subr.mxu0 0.0
    %195 = vmatpush1.xpose.msra.mxu0 %v169
    %196 = vmatprep.subr.mxu0 0.0
    %197 = vmatpush1.xpose.msra.mxu0 %v170
    %198 = vmatprep.subr.mxu0 0.0
    %199 = vmatpush1.xpose.msra.mxu0 %v171
    %200 = vmatprep.subr.mxu0 0.0
    %201 = vmatpush1.xpose.msra.mxu0 %v172
    %202 = vmatprep.subr.mxu0 0.0
    %203 = vmatpush1.xpose.msra.mxu0 %v173
    %204 = vmatprep.subr.mxu0 0.0
    %205 = vmatpush1.xpose.msra.mxu0 %v174
    %206 = vmatprep.subr.mxu0 0.0
    %207 = vmatpush1.xpose.msra.mxu0 %v175
    %208 = vmatprep.subr.mxu0 0.0
    %209 = vmatpush1.xpose.msra.mxu0 0.0
    %210 = vmatprep.subr.mxu0 0.0
    %211 = vmatpush1.xpose.msra.mxu0 0.0
    %212 = vmatprep.subr.mxu0 0.0
    %213 = vmatpush1.xpose.msra.mxu0 0.0
    %214 = vmatprep.subr.mxu0 0.0
    %215 = vmatpush1.xpose.msra.mxu0 0.0
    %216 = vmatprep.subr.mxu0 0.0
    %217 = vmatpush1.xpose.msra.mxu0 0.0
    %218 = vmatprep.subr.mxu0 0.0
    %219 = vmatpush1.xpose.msra.mxu0 0.0
    %220 = vmatprep.subr.mxu0 0.0
    %221 = vmatpush1.xpose.msra.mxu0 0.0
    %222 = vmatprep.subr.mxu0 0.0
    %223 = vmatpush1.xpose.msra.mxu0 0.0
    %224 = vmatprep.subr.mxu0 0.0
    %225 = vmatpush1.xpose.msra.mxu0 0.0
    %226 = vmatprep.subr.mxu0 0.0
    %227 = vmatpush1.xpose.msra.mxu0 0.0
    %228 = vmatprep.subr.mxu0 0.0
    %229 = vmatpush1.xpose.msra.mxu0 0.0
    %230 = vmatprep.subr.mxu0 0.0
    %231 = vmatpush1.xpose.msra.mxu0 0.0
    %232 = vmatprep.subr.mxu0 0.0
    %233 = vmatpush1.xpose.msra.mxu0 0.0
    %234 = vmatprep.subr.mxu0 0.0
    %235 = vmatpush1.xpose.msra.mxu0 0.0
    %236 = vmatprep.subr.mxu0 0.0
    %237 = vmatpush1.xpose.msra.mxu0 0.0
    %238 = vmatprep.subr.mxu0 0.0
    %239 = vmatpush1.xpose.msra.mxu0 0.0
    %240 = vmatprep.mubr.f32.mxu0 0.0
    %241 = vmatmul.mubr.f32.gmra.mrb[0].mxu0 %v125
    %v242 = vpop.f32.mrb[0].mxu0
    %v243 = vadd.f32 0.0, %v242
    %v244 = vpop.f32.mrb[0].mxu0
    %245 = vdwg.mxu0
    %v246 = vsub.f32 0.0, %v125
    %v247 = vadd.f32 %v246, %v126
    %v248 = vmul.f32 %v247, 0.1
    %v249 = vadd.f32 %v125, %v248
    %v250 = vadd.f32 %v249, %v243
    %v251 = vmul.f32 %v126, 0.8
    %252 = vmatprep.subr.mxu0 0.0
    %253 = vmatpush1.xpose.msra.mxu0 %v128
    %254 = vmatprep.subr.mxu0 0.0
    %255 = vmatpush1.xpose.msra.mxu0 %v129
    %256 = vmatprep.subr.mxu0 0.0
    %257 = vmatpush1.xpose.msra.mxu0 %v130
    %258 = vmatprep.subr.mxu0 0.0
    %259 = vmatpush1.xpose.msra.mxu0 %v131
    %260 = vmatprep.subr.mxu0 0.0
    %261 = vmatpush1.xpose.msra.mxu0 %v132
    %262 = vmatprep.subr.mxu0 0.0
    %263 = vmatpush1.xpose.msra.mxu0 %v133
    %264 = vmatprep.subr.mxu0 0.0
    %265 = vmatpush1.xpose.msra.mxu0 %v134
    %266 = vmatprep.subr.mxu0 0.0
    %267 = vmatpush1.xpose.msra.mxu0 %v135
    %268 = vmatprep.subr.mxu0 0.0
    %269 = vmatpush1.xpose.msra.mxu0 %v136
    %270 = vmatprep.subr.mxu0 0.0
    %271 = vmatpush1.xpose.msra.mxu0 %v137
    %272 = vmatprep.subr.mxu0 0.0
    %273 = vmatpush1.xpose.msra.mxu0 %v138
    %274 = vmatprep.subr.mxu0 0.0
    %275 = vmatpush1.xpose.msra.mxu0 %v139
    %276 = vmatprep.subr.mxu0 0.0
    %277 = vmatpush1.xpose.msra.mxu0 %v140
    %278 = vmatprep.subr.mxu0 0.0
    %279 = vmatpush1.xpose.msra.mxu0 %v141
    %280 = vmatprep.subr.mxu0 0.0
    %281 = vmatpush1.xpose.msra.mxu0 %v142
    %282 = vmatprep.subr.mxu0 0.0
    %283 = vmatpush1.xpose.msra.mxu0 %v143
    %284 = vmatprep.subr.mxu0 0.0
    %285 = vmatpush1.xpose.msra.mxu0 0.0
    %286 = vmatprep.subr.mxu0 0.0
    %287 = vmatpush1.xpose.msra.mxu0 0.0
    %288 = vmatprep.subr.mxu0 0.0
    %289 = vmatpush1.xpose.msra.mxu0 0.0
    %290 = vmatprep.subr.mxu0 0.0
    %291 = vmatpush1.xpose.msra.mxu0 0.0
    %292 = vmatprep.subr.mxu0 0.0
    %293 = vmatpush1.xpose.msra.mxu0 0.0
    %294 = vmatprep.subr.mxu0 0.0
    %295 = vmatpush1.xpose.msra.mxu0 0.0
    %296 = vmatprep.subr.mxu0 0.0
    %297 = vmatpush1.xpose.msra.mxu0 0.0
    %298 = vmatprep.subr.mxu0 0.0
    %299 = vmatpush1.xpose.msra.mxu0 0.0
    %300 = vmatprep.subr.mxu0 0.0
    %301 = vmatpush1.xpose.msra.mxu0 0.0
    %302 = vmatprep.subr.mxu0 0.0
    %303 = vmatpush1.xpose.msra.mxu0 0.0
    %304 = vmatprep.subr.mxu0 0.0
    %305 = vmatpush1.xpose.msra.mxu0 0.0
    %306 = vmatprep.subr.mxu0 0.0
    %307 = vmatpush1.xpose.msra.mxu0 0.0
    %308 = vmatprep.subr.mxu0 0.0
    %309 = vmatpush1.xpose.msra.mxu0 0.0
    %310 = vmatprep.subr.mxu0 0.0
    %311 = vmatpush1.xpose.msra.mxu0 0.0
    %312 = vmatprep.subr.mxu0 0.0
    %313 = vmatpush1.xpose.msra.mxu0 0.0
    %314 = vmatprep.subr.mxu0 0.0
    %315 = vmatpush1.xpose.msra.mxu0 0.0
    %316 = vmatprep.mubr.f32.mxu0 0.0
    %317 = vmatmul.mubr.f32.gmra.mrb[0].mxu0 %v123
    %v318 = vpop.f32.mrb[0].mxu0
    %v319 = vadd.f32 0.0, %v318
    %v320 = vpop.f32.mrb[0].mxu0
    %321 = vdwg.mxu0
    %322 = vmatprep.subr.mxu0 0.0
    %323 = vmatpush1.xpose.msra.mxu0 %v144
    %324 = vmatprep.subr.mxu0 0.0
    %325 = vmatpush1.xpose.msra.mxu0 %v145
    %326 = vmatprep.subr.mxu0 0.0
    %327 = vmatpush1.xpose.msra.mxu0 %v146
    %328 = vmatprep.subr.mxu0 0.0
    %329 = vmatpush1.xpose.msra.mxu0 %v147
    %330 = vmatprep.subr.mxu0 0.0
    %331 = vmatpush1.xpose.msra.mxu0 %v148
    %332 = vmatprep.subr.mxu0 0.0
    %333 = vmatpush1.xpose.msra.mxu0 %v149
    %334 = vmatprep.subr.mxu0 0.0
    %335 = vmatpush1.xpose.msra.mxu0 %v150
    %336 = vmatprep.subr.mxu0 0.0
    %337 = vmatpush1.xpose.msra.mxu0 %v151
    %338 = vmatprep.subr.mxu0 0.0
    %339 = vmatpush1.xpose.msra.mxu0 %v152
    %340 = vmatprep.subr.mxu0 0.0
    %341 = vmatpush1.xpose.msra.mxu0 %v153
    %342 = vmatprep.subr.mxu0 0.0
    %343 = vmatpush1.xpose.msra.mxu0 %v154
    %344 = vmatprep.subr.mxu0 0.0
    %345 = vmatpush1.xpose.msra.mxu0 %v155
    %346 = vmatprep.subr.mxu0 0.0
    %347 = vmatpush1.xpose.msra.mxu0 %v156
    %348 = vmatprep.subr.mxu0 0.0
    %349 = vmatpush1.xpose.msra.mxu0 %v157
    %350 = vmatprep.subr.mxu0 0.0
    %351 = vmatpush1.xpose.msra.mxu0 %v158
    %352 = vmatprep.subr.mxu0 0.0
    %353 = vmatpush1.xpose.msra.mxu0 %v159
    %354 = vmatprep.subr.mxu0 0.0
    %355 = vmatpush1.xpose.msra.mxu0 0.0
    %356 = vmatprep.subr.mxu0 0.0
    %357 = vmatpush1.xpose.msra.mxu0 0.0
    %358 = vmatprep.subr.mxu0 0.0
    %359 = vmatpush1.xpose.msra.mxu0 0.0
    %360 = vmatprep.subr.mxu0 0.0
    %361 = vmatpush1.xpose.msra.mxu0 0.0
    %362 = vmatprep.subr.mxu0 0.0
    %363 = vmatpush1.xpose.msra.mxu0 0.0
    %364 = vmatprep.subr.mxu0 0.0
    %365 = vmatpush1.xpose.msra.mxu0 0.0
    %366 = vmatprep.subr.mxu0 0.0
    %367 = vmatpush1.xpose.msra.mxu0 0.0
    %368 = vmatprep.subr.mxu0 0.0
    %369 = vmatpush1.xpose.msra.mxu0 0.0
    %370 = vmatprep.subr.mxu0 0.0
    %371 = vmatpush1.xpose.msra.mxu0 0.0
    %372 = vmatprep.subr.mxu0 0.0
    %373 = vmatpush1.xpose.msra.mxu0 0.0
    %374 = vmatprep.subr.mxu0 0.0
    %375 = vmatpush1.xpose.msra.mxu0 0.0
    %376 = vmatprep.subr.mxu0 0.0
    %377 = vmatpush1.xpose.msra.mxu0 0.0
    %378 = vmatprep.subr.mxu0 0.0
    %379 = vmatpush1.xpose.msra.mxu0 0.0
    %380 = vmatprep.subr.mxu0 0.0
    %381 = vmatpush1.xpose.msra.mxu0 0.0
    %382 = vmatprep.subr.mxu0 0.0
    %383 = vmatpush1.xpose.msra.mxu0 0.0
    %384 = vmatprep.subr.mxu0 0.0
    %385 = vmatpush1.xpose.msra.mxu0 0.0
    %386 = vmatprep.mubr.f32.mxu0 0.0
    %387 = vmatmul.mubr.f32.gmra.mrb[0].mxu0 %v124
    %v388 = vpop.f32.mrb[0].mxu0
    %v389 = vadd.f32 0.0, %v388
    %v390 = vpop.f32.mrb[0].mxu0
    %391 = vdwg.mxu0
    %v392 = vadd.f32 %v251, %v319
    %v393 = vadd.f32 %v392, %v389
    %vm394 = vcmp.gt.f32.partialorder %v250, 1.0
    %vm395 = vcmp.gt.f32.partialorder %v127, 0.0
    %vm396 = vmxor %vm395, 1
    %vm397 = vmand %vm394, %vm396
    %v398 = vsel %vm394, 0.0, %v250
    %v399 = vsel %vm395, %v125, %v398
    %v400 = vsel %vm395, 1, 0
    %v401 = vcvt.s32.f32 %v400
    %v402 = vsub.f32 %v127, %v401
    %v403 = vmax.f32 %v402, 0.0
    %v404 = vsel %vm397, 5.0, %v403
    %v405 = vsel %vm397, 1, 0
    %v406 = vcvt.s32.f32 %v405
    %407 = vst [vmem:[#allocation14] sm:$0xff] %v406
    %408 = vst [vmem:[#allocation15] sm:$0xff] %v399
    %409 = vst [vmem:[#allocation17] sm:$0xff] %v393
    %410 = vst [vmem:[#allocation18] sm:$0xff] %v404
    // Predicated region
    $region62: #{tpu_custom_call.1} parent=1 // pred_check
      _
    $region63: #{tpu_custom_call.1} parent=1 // pred_check_branch
      %412 = sbr.rel (0) target = $region65
    $region64: #{tpu_custom_call.1} parent=1 // pred_region
      %s414 = ssub.s32 128, 128
      %415 = vsyncadd [#allocation4], %s414
      %s417 = sshll.u32 [#allocation14], 4
      %s418 = int_to_ptr.vmem [resolvable:$true] %s417
      %420 = dma.vmem_to_hbm [thread:$0]  %s418, 128, %s8, [#allocation4]
    $region65: #{tpu_custom_call.1} parent=1 // pred_fallthru
      _
    // Predicated region
    $region66: #{tpu_custom_call.1} parent=1 // pred_check
      _
    $region67: #{tpu_custom_call.1} parent=1 // pred_check_branch
      %422 = sbr.rel (0) target = $region69
    $region68: #{tpu_custom_call.1} parent=1 // pred_region
      %s424 = ssub.s32 128, 128
      %425 = vsyncadd [#allocation16], %s424
      %s427 = sshll.u32 [#allocation15], 4
      %s428 = int_to_ptr.vmem [resolvable:$true] %s427
      %430 = dma.vmem_to_hbm [thread:$0]  %s428, 128, %s9, [#allocation16]
    $region69: #{tpu_custom_call.1} parent=1 // pred_fallthru
      _
    // Predicated region
    $region70: #{tpu_custom_call.1} parent=1 // pred_check
      _
    $region71: #{tpu_custom_call.1} parent=1 // pred_check_branch
      %432 = sbr.rel (0) target = $region73
    $region72: #{tpu_custom_call.1} parent=1 // pred_region
      %s434 = ssub.s32 128, 128
      %435 = vsyncadd [#allocation16], %s434
      %s437 = sshll.u32 [#allocation17], 4
      %s438 = int_to_ptr.vmem [resolvable:$true] %s437
      %440 = dma.vmem_to_hbm [thread:$0]  %s438, 128, %s10, [#allocation16]
    $region73: #{tpu_custom_call.1} parent=1 // pred_fallthru
      _
    // Predicated region
    $region74: #{tpu_custom_call.1} parent=1 // pred_check
      _
    $region75: #{tpu_custom_call.1} parent=1 // pred_check_branch
      %442 = sbr.rel (0) target = $region77
    $region76: #{tpu_custom_call.1} parent=1 // pred_region
      %s444 = ssub.s32 128, 128
      %445 = vsyncadd [#allocation19], %s444
      %s447 = sshll.u32 [#allocation18], 4
      %s448 = int_to_ptr.vmem [resolvable:$true] %s447
      %450 = dma.vmem_to_hbm [thread:$0]  %s448, 128, %s11, [#allocation19]
    $region77: #{tpu_custom_call.1} parent=1 // pred_fallthru
      _
    // Predicated region
    $region78: #{tpu_custom_call.1} parent=1 // pred_check
      _
    $region79: #{tpu_custom_call.1} parent=1 // pred_check_branch
      %452 = sbr.rel (0) target = $region81
    $region80: #{tpu_custom_call.1} parent=1 // pred_region
      %453 = dma.done [#allocation4], 128
    $region81: #{tpu_custom_call.1} parent=1 // pred_fallthru
      _
    // Predicated region
    $region82: #{tpu_custom_call.1} parent=1 // pred_check
      _
    $region83: #{tpu_custom_call.1} parent=1 // pred_check_branch
      %455 = sbr.rel (0) target = $region85
    $region84: #{tpu_custom_call.1} parent=1 // pred_region
      %456 = dma.done [#allocation16], 128
    $region85: #{tpu_custom_call.1} parent=1 // pred_fallthru
      _
    // Predicated region
    $region86: #{tpu_custom_call.1} parent=1 // pred_check
      _
    $region87: #{tpu_custom_call.1} parent=1 // pred_check_branch
      %458 = sbr.rel (0) target = $region89
    $region88: #{tpu_custom_call.1} parent=1 // pred_region
      %459 = dma.done [#allocation16], 128
    $region89: #{tpu_custom_call.1} parent=1 // pred_fallthru
      _
    // Predicated region
    $region90: #{tpu_custom_call.1} parent=1 // pred_check
      _
    $region91: #{tpu_custom_call.1} parent=1 // pred_check_branch
      %461 = sbr.rel (0) target = $region93
    $region92: #{tpu_custom_call.1} parent=1 // pred_region
      %462 = dma.done [#allocation19], 128
    $region93: #{tpu_custom_call.1} parent=1 // pred_fallthru
      _
    %463 = vsyncpa [#allocation3], 1
    %464 = vsyncpa [#allocation6], 1
    %465 = vsyncpa [#allocation9], 1
    %466 = vsyncpa [#allocation12], 1
    %467 = vsyncpa [#allocation4], 1
    %468 = vsyncpa [#allocation16], 1
    %469 = vsyncpa [#allocation19], 1

</llo_original>
